<compile_context>
chip_gen: v5e
topology: v5e:2x2
jax: 0.10.0
libtpu: 0.0.40
codegen_flags: <defaults>
</compile_context>

<pallas_src>
import jax
import jax.numpy as jnp
from jax.experimental import pallas as pl
from jax.experimental.pallas import tpu as pltpu


def _round_up(n, m):
    return ((n + m - 1) // m) * m


def _cdiv(a, b):
    return (a + b - 1) // b


def _tile_bytes(rows, cols, itemsize):
    # VMEM footprint of a (rows, cols) tile after (8, 128) layout padding.
    return (_round_up(max(int(rows), 1), 8)
            * _round_up(max(int(cols), 1), 128) * int(itemsize))


def _tpu_vmem_and_cores():
    """Best-effort hardware query with conservative fallbacks.

    The fallback (64 MiB VMEM, 2 TensorCores) is safe on every current chip:
    a failed query only makes the tiling slightly more conservative — it never
    masks a kernel compile/runtime error.
    """
    vmem_cap = 64 << 20      # v7x per-TensorCore VMEM (smallest current chip)
    num_cores = 2            # assume megacore; a 2-way split costs <1us on 1-TC chips
    get_info = getattr(pltpu, "get_tpu_info", None)
    if get_info is not None:
        try:
            info = get_info()
        except Exception:    # hardware-query fallback only; kernel errors are not caught
            info = None
        if info is not None:
            cap = getattr(info, "vmem_capacity_bytes", None)
            if isinstance(cap, int) and cap > 0:
                vmem_cap = cap
            for name in ("num_tensorcores", "tensorcores_per_chip",
                         "tensorcore_count", "num_cores", "core_count"):
                val = getattr(info, name, None)
                if isinstance(val, int) and val > 0:
                    num_cores = val
                    break
    return vmem_cap, num_cores


def _fe_kernel(x_ref, w1_ref, b1_ref, w2_ref, b2_ref, x1_ref, x2_ref):
    # Layer 1: cast the batch tile to the weights' (MXU) dtype in VMEM,
    # accumulate in f32, bias + ReLU in f32.
    x = x_ref[...].astype(w1_ref.dtype)
    h1 = jnp.dot(x, w1_ref[...], preferred_element_type=jnp.float32)
    x1 = jnp.maximum(h1 + b1_ref[...].astype(jnp.float32), 0.0)
    x1_ref[...] = x1.astype(x1_ref.dtype)
    # Layer 2 feeds the MXU the compute-dtype cast of x1; f32 accumulation.
    h2 = jnp.dot(x1.astype(w2_ref.dtype), w2_ref[...],
                 preferred_element_type=jnp.float32)
    x2 = jnp.maximum(h2 + b2_ref[...].astype(jnp.float32), 0.0)
    x2_ref[...] = x2.astype(x2_ref.dtype)


def prepare_params(w1, b1, w2, b2, compute_dtype=jnp.bfloat16):
    """One-time weight preparation, hoisted out of the per-call path.

    Casting weights to bf16 halves their HBM traffic and uses the fast MXU
    path at ~0.3-0.5% relative error vs PyTorch's f32 Linear; pass
    compute_dtype=jnp.float32 for bit-closer activations.  Weights are stored
    already transposed ([F_in, H]) so the kernel computes x @ W directly.
    """
    return (w1.astype(compute_dtype),
            jnp.reshape(b1, (1, -1)).astype(jnp.float32),
            w2.astype(compute_dtype),
            jnp.reshape(b2, (1, -1)).astype(jnp.float32))


def feature_extractor_forward(x, w1, b1, w2, b2, *, tb=1024, out_dtype=None):
    """x: [B, F_in]; w1: [F_in, H1]; b1: [1,H1] or [H1]; w2: [H1, H2]; b2: [1,H2] or [H2].

    Run the weights through `prepare_params` once (outside the per-step path)
    so the dtype cast is not paid on every call.
    """
    B, F_in = x.shape
    assert w1.ndim == 2 and w1.shape[0] == F_in, "w1 must be [F_in, H1] (pre-transposed)"
    H1 = w1.shape[1]
    assert w2.ndim == 2 and w2.shape[0] == H1, "w2 must be [H1, H2] (pre-transposed)"
    H2 = w2.shape[1]
    assert b1.size == H1 and b2.size == H2, "bias sizes must match hidden sizes"
    b1 = jnp.reshape(b1, (1, H1))
    b2 = jnp.reshape(b2, (1, H2))
    out_dtype = x.dtype if out_dtype is None else out_dtype

    x_isz = jnp.dtype(x.dtype).itemsize
    w_isz = jnp.dtype(w1.dtype).itemsize
    o_isz = jnp.dtype(out_dtype).itemsize

    vmem_cap, num_cores = _tpu_vmem_and_cores()
    budget = (vmem_cap // 4) * 3        # 48 MiB on v7x, 96 MiB on v5e/v6e

    # Batch-independent working set: weights + biases (2 buffers are
    # allocated, but constant-index blocks are only copied once).
    weight_bufs = 2
    fixed = weight_bufs * (_tile_bytes(F_in, H1, w_isz)
                           + _tile_bytes(H1, H2, w_isz)
                           + _tile_bytes(1, H1, 4)
                           + _tile_bytes(1, H2, 4))
    # Batch-dependent bytes per row: x tile + both output tiles, double-buffered.
    per_row = (2 * _tile_bytes(8, F_in, x_isz)
               + 2 * _tile_bytes(8, H1, o_isz)
               + 2 * _tile_bytes(8, H2, o_isz)) // 8

    # TODO(synk): if F_in*H1 + H1*H2 ever outgrows `budget`, add a trailing
    # 'arbitrary' reduction grid axis over F_in/H1 tiles (256-wide N tiles for
    # the 256x256 MXUs) with a pl.when(k==0)-initialized f32 accumulator
    # instead of relying on whole-weight VMEM residency.
    cap_rows = max(8, ((budget - fixed) // max(per_row, 1)) // 8 * 8)

    want_split = num_cores >= 2 and B >= 16
    if B <= min(tb, cap_rows) and not want_split:
        tb_eff = B                              # single full-batch tile (any B)
    else:
        tb_eff = max(8, (min(tb, cap_rows, _round_up(B, 8)) // 8) * 8)
        if want_split:
            # Balanced tiles so megacore sharding keeps both TCs busy.
            n_tiles = max(_cdiv(B, tb_eff), num_cores)
            tb_eff = max(8, min(_round_up(_cdiv(B, n_tiles), 8), cap_rows))
    grid = (_cdiv(B, tb_eff),)

    need = fixed + per_row * _round_up(tb_eff, 8)
    vmem_limit = max(int(need * 1.3) + (4 << 20), 16 << 20)
    vmem_limit = min(vmem_limit, vmem_cap - (8 << 20))   # headroom for compiler scratch

    return pl.pallas_call(
        _fe_kernel,
        out_shape=(
            jax.ShapeDtypeStruct((B, H1), out_dtype),
            jax.ShapeDtypeStruct((B, H2), out_dtype),
        ),
        grid=grid,
        in_specs=[
            pl.BlockSpec((tb_eff, F_in), lambda i: (i, 0)),   # x batch tile (unpadded)
            pl.BlockSpec((F_in, H1), lambda i: (0, 0)),       # W1 (VMEM-resident)
            pl.BlockSpec((1, H1), lambda i: (0, 0)),          # b1
            pl.BlockSpec((H1, H2), lambda i: (0, 0)),         # W2 (VMEM-resident)
            pl.BlockSpec((1, H2), lambda i: (0, 0)),          # b2
        ],
        out_specs=(
            pl.BlockSpec((tb_eff, H1), lambda i: (i, 0)),     # x1 (unpadded)
            pl.BlockSpec((tb_eff, H2), lambda i: (i, 0)),     # x2 (unpadded)
        ),
        compiler_params=pltpu.CompilerParams(
            dimension_semantics=("parallel",),
            vmem_limit_bytes=vmem_limit,
        ),
    )(x, w1, b1, w2, b2)


def init_params(key, f_in, h1, h2, dtype=jnp.float32):
    """Deterministic init mirroring nn.Linear's uniform(-1/sqrt(fan_in), ...)."""
    k1, k2, k3, k4 = jax.random.split(key, 4)
    bnd1 = 1.0 / jnp.sqrt(f_in)
    bnd2 = 1.0 / jnp.sqrt(h1)
    # Stored already transposed: [F_in, H] so the kernel does x @ W directly.
    w1 = jax.random.uniform(k1, (f_in, h1), dtype, -bnd1, bnd1)
    b1 = jax.random.uniform(k2, (1, h1), dtype, -bnd1, bnd1)
    w2 = jax.random.uniform(k3, (h1, h2), dtype, -bnd2, bnd2)
    b2 = jax.random.uniform(k4, (1, h2), dtype, -bnd2, bnd2)
    return w1, b1, w2, b2


def reference_forward(x, w1, b1, w2, b2):
    x1 = jnp.maximum(x @ w1 + b1, 0.0)
    x2 = jnp.maximum(x1 @ w2 + b2, 0.0)
    return x1, x2


def reference_forward_bf16(x, w1, b1, w2, b2):
    # Emulates the kernel's precision: bf16 MXU inputs, f32 accumulate/bias.
    bf = jnp.bfloat16
    h1 = jnp.dot(x.astype(bf), w1.astype(bf), preferred_element_type=jnp.float32)
    x1 = jnp.maximum(h1 + b1.astype(jnp.float32), 0.0)
    h2 = jnp.dot(x1.astype(bf), w2.astype(bf), preferred_element_type=jnp.float32)
    x2 = jnp.maximum(h2 + b2.astype(jnp.float32), 0.0)
    return x1, x2


if __name__ == "__main__":
    B, F_IN, H1, H2 = 64, 16, 32, 64

    key = jax.random.PRNGKey(0)
    kx, kp = jax.random.split(key)
    x = jax.random.normal(kx, (B, F_IN), jnp.float32)
    w1, b1, w2, b2 = init_params(kp, F_IN, H1, H2)

    # Weight cast hoisted out of the per-call path (done exactly once here).
    w1c, b1c, w2c, b2c = prepare_params(w1, b1, w2, b2)

    x1, x2 = feature_extractor_forward(x, w1c, b1c, w2c, b2c)
    jax.block_until_ready((x1, x2))

    assert x1.shape == (B, H1) and x2.shape == (B, H2)
    assert x1.dtype == x.dtype and x2.dtype == x.dtype

    # Tight check vs a reference that mirrors the kernel's bf16/f32 precision.
    e1, e2 = reference_forward_bf16(x, w1, b1, w2, b2)
    assert jnp.allclose(x1, e1, atol=5e-3, rtol=5e-3)
    assert jnp.allclose(x2, e2, atol=5e-3, rtol=5e-3)

    # Loose check vs the full-f32 reference (bf16 MXU inputs -> ~0.4% rel err).
    r1, r2 = reference_forward(x, w1, b1, w2, b2)
    assert jnp.allclose(x1, r1, atol=5e-2, rtol=5e-2)
    assert jnp.allclose(x2, r2, atol=5e-2, rtol=5e-2)

    print("KERNEL_OK")
</pallas_src>

<mosaic_0001>
module attributes {stable_mosaic.version = 11 : i64} {
  func.func @_fe_kernel(%arg0: i32, %arg1: memref<32x16xf32, #tpu.memory_space<vmem>>, %arg2: memref<16x32xbf16, #tpu.memory_space<vmem>>, %arg3: memref<1x32xf32, #tpu.memory_space<vmem>>, %arg4: memref<32x64xbf16, #tpu.memory_space<vmem>>, %arg5: memref<1x64xf32, #tpu.memory_space<vmem>>, %arg6: memref<32x32xf32, #tpu.memory_space<vmem>>, %arg7: memref<32x64xf32, #tpu.memory_space<vmem>>) attributes {dimension_semantics = [#tpu.dimension_semantics<parallel>], iteration_bounds = array<i64: 2>, scalar_prefetch = 0 : i64, scratch_operands = 0 : i64, tpu.core_type = #tpu.core_type<tc>, window_params = [{transform_indices = @transform_0, window_bounds = array<i64: 32, 16>}, {pipeline_mode = #tpu.pipeline_mode<synchronous>, transform_indices = @transform_1, window_bounds = array<i64: 16, 32>}, {pipeline_mode = #tpu.pipeline_mode<synchronous>, transform_indices = @transform_2, window_bounds = array<i64: 1, 32>}, {pipeline_mode = #tpu.pipeline_mode<synchronous>, transform_indices = @transform_3, window_bounds = array<i64: 32, 64>}, {pipeline_mode = #tpu.pipeline_mode<synchronous>, transform_indices = @transform_4, window_bounds = array<i64: 1, 64>}, {transform_indices = @transform_5, window_bounds = array<i64: 32, 32>}, {transform_indices = @transform_6, window_bounds = array<i64: 32, 64>}]} {
    %c0 = arith.constant 0 : index
    %c0_0 = arith.constant 0 : index
    %0 = vector.load %arg1[%c0, %c0_0] : memref<32x16xf32, #tpu.memory_space<vmem>>, vector<32x16xf32>
    %1 = arith.truncf %0 : vector<32x16xf32> to vector<32x16xbf16>
    %c0_1 = arith.constant 0 : index
    %c0_2 = arith.constant 0 : index
    %2 = vector.load %arg2[%c0_1, %c0_2] : memref<16x32xbf16, #tpu.memory_space<vmem>>, vector<16x32xbf16>
    %cst = arith.constant dense<0.000000e+00> : vector<32x32xf32>
    %3 = tpu.matmul %1, %2, %cst {dimension_numbers = #tpu.dot_dimension_numbers<[1], [0], [0], [1], [0, 0, 1, 1], [], []>} : vector<32x16xbf16>, vector<16x32xbf16>, vector<32x32xf32> -> vector<32x32xf32>
    %c0_3 = arith.constant 0 : index
    %c0_4 = arith.constant 0 : index
    %4 = vector.load %arg3[%c0_3, %c0_4] : memref<1x32xf32, #tpu.memory_space<vmem>>, vector<1x32xf32>
    %5 = vector.broadcast %4 : vector<1x32xf32> to vector<32x32xf32>
    %6 = arith.addf %3, %5 : vector<32x32xf32>
    %cst_5 = arith.constant 0.000000e+00 : f32
    %7 = vector.broadcast %cst_5 : f32 to vector<32x32xf32>
    %8 = arith.maximumf %6, %7 : vector<32x32xf32>
    %c0_6 = arith.constant 0 : index
    %c0_7 = arith.constant 0 : index
    %9 = vector.load %arg6[%c0_6, %c0_7] : memref<32x32xf32, #tpu.memory_space<vmem>>, vector<32x32xf32>
    tpu.vector_store %arg6[%c0_6, %c0_7], %8 {strides = array<i32>} : memref<32x32xf32, #tpu.memory_space<vmem>>, vector<32x32xf32>,
    %10 = arith.truncf %8 : vector<32x32xf32> to vector<32x32xbf16>
    %c0_8 = arith.constant 0 : index
    %c0_9 = arith.constant 0 : index
    %11 = vector.load %arg4[%c0_8, %c0_9] : memref<32x64xbf16, #tpu.memory_space<vmem>>, vector<32x64xbf16>
    %cst_10 = arith.constant dense<0.000000e+00> : vector<32x64xf32>
    %12 = tpu.matmul %10, %11, %cst_10 {dimension_numbers = #tpu.dot_dimension_numbers<[1], [0], [0], [1], [0, 0, 1, 1], [], []>} : vector<32x32xbf16>, vector<32x64xbf16>, vector<32x64xf32> -> vector<32x64xf32>
    %c0_11 = arith.constant 0 : index
    %c0_12 = arith.constant 0 : index
    %13 = vector.load %arg5[%c0_11, %c0_12] : memref<1x64xf32, #tpu.memory_space<vmem>>, vector<1x64xf32>
    %14 = vector.broadcast %13 : vector<1x64xf32> to vector<32x64xf32>
    %15 = arith.addf %12, %14 : vector<32x64xf32>
    %cst_13 = arith.constant 0.000000e+00 : f32
    %16 = vector.broadcast %cst_13 : f32 to vector<32x64xf32>
    %17 = arith.maximumf %15, %16 : vector<32x64xf32>
    %c0_14 = arith.constant 0 : index
    %c0_15 = arith.constant 0 : index
    %18 = vector.load %arg7[%c0_14, %c0_15] : memref<32x64xf32, #tpu.memory_space<vmem>>, vector<32x64xf32>
    tpu.vector_store %arg7[%c0_14, %c0_15], %17 {strides = array<i32>} : memref<32x64xf32, #tpu.memory_space<vmem>>, vector<32x64xf32>,
    return
  }
  func.func @transform_0(%arg0: i32) -> (i32, i32) {
    %c0_i32 = arith.constant 0 : i32
    %c0_i32_0 = arith.constant 0 : i32
    return %arg0, %c0_i32 : i32, i32
  }
  func.func @transform_1(%arg0: i32) -> (i32, i32) {
    %c0_i32 = arith.constant 0 : i32
    %c0_i32_0 = arith.constant 0 : i32
    %c0_i32_1 = arith.constant 0 : i32
    return %c0_i32, %c0_i32_0 : i32, i32
  }
  func.func @transform_2(%arg0: i32) -> (i32, i32) {
    %c0_i32 = arith.constant 0 : i32
    %c0_i32_0 = arith.constant 0 : i32
    %c0_i32_1 = arith.constant 0 : i32
    return %c0_i32, %c0_i32_0 : i32, i32
  }
  func.func @transform_3(%arg0: i32) -> (i32, i32) {
    %c0_i32 = arith.constant 0 : i32
    %c0_i32_0 = arith.constant 0 : i32
    %c0_i32_1 = arith.constant 0 : i32
    return %c0_i32, %c0_i32_0 : i32, i32
  }
  func.func @transform_4(%arg0: i32) -> (i32, i32) {
    %c0_i32 = arith.constant 0 : i32
    %c0_i32_0 = arith.constant 0 : i32
    %c0_i32_1 = arith.constant 0 : i32
    return %c0_i32, %c0_i32_0 : i32, i32
  }
  func.func @transform_5(%arg0: i32) -> (i32, i32) {
    %c0_i32 = arith.constant 0 : i32
    %c0_i32_0 = arith.constant 0 : i32
    return %arg0, %c0_i32 : i32, i32
  }
  func.func @transform_6(%arg0: i32) -> (i32, i32) {
    %c0_i32 = arith.constant 0 : i32
    %c0_i32_0 = arith.constant 0 : i32
    return %arg0, %c0_i32 : i32, i32
  }
}

</mosaic_0001>

<llo_original>
// kernel: tpu_custom_call.1
$region0: #{tpu_custom_call.1}
  #allocation0 [shape = 'u32[]', space=smem, size = 0x4, offset = 0x4, fixed_abs, tag = 'smem constant byte address 0x4 - core index']
  #allocation1 [shape = 'u32[72,128]{1,0:T(1,128)}', space=vmem, size = 0x9000, scoped, tag = 'internal scratch']
  %s0 = inlined_call_operand.vmem [shape: f32[64,16], index: 0, kind: input, shape index: {}]
  %s1 = inlined_call_operand.vmem [shape: bf16[16,32], index: 1, kind: input, shape index: {}]
  %s2 = inlined_call_operand.vmem [shape: f32[1,32], index: 2, kind: input, shape index: {}]
  %s3 = inlined_call_operand.vmem [shape: bf16[32,64], index: 3, kind: input, shape index: {}]
  %s4 = inlined_call_operand.vmem [shape: f32[1,64], index: 4, kind: input, shape index: {}]
  %s5 = inlined_call_operand.vmem [shape: f32[64,32], index: 5, kind: output, shape index: {0}]
  %s6 = inlined_call_operand.hbm [shape: f32[64,64], index: 6, kind: output, shape index: {1}]
  %7 = xla_tuple %s5, %s6
  %s8 = sld [smem:[#allocation0]]
  $region61: #{tpu_custom_call.1} parent=0
    _
  %s10 = ssub.s32 1, %s8
  %s11 = scalar_select 0, %s10, %s8
  $region1: #{tpu_custom_call.1} parent=0
    #allocation2 [shape = 'u8[32768]{0}', space=vmem, size = 0x8000, scoped, tag = 'output window, operand 1']
    #allocation3 [shape = 's32[2]{0}', space=sflag, size = 0x8, scoped, tag = 'scoped memory for tpu_custom_call.1']
    %12 = vsyncpa [#allocation3], 0
    %s13 = scalar_lea.sflag [#allocation3], 1
    %14 = vsyncpa %s13, 0
    loop: start=0, step=1, limit=4
    $region2: #{tpu_custom_call.1} parent=1 // loop_pre_header
      _
    $region3: #{tpu_custom_call.1} parent=1 // loop_header
      %s16 = sphi 0, %s20
      %p17 = scmp.ge.s32.totalorder %s16, 4
      %s26 = sphi 0, %s28
      %s29 = sphi 0, %s26
      %s30 = sphi 0, %s29
      %s46 = sphi 0, %s30
      %s50 = sphi 0, %s50
      %s52 = sphi 0, %s50
      %s53 = sphi 0, %s52
      %s67 = sphi 0, %s53
      %s71 = sphi 0, %s71
      %s73 = sphi 0, %s71
      %s74 = sphi 0, %s73
      %s88 = sphi 0, %s74
      %s92 = sphi 0, %s92
      %s94 = sphi 0, %s92
      %s95 = sphi 0, %s94
      %s109 = sphi 0, %s95
      %s113 = sphi 0, %s113
      %s115 = sphi 0, %s113
      %s116 = sphi 0, %s115
      %s130 = sphi 0, %s116
      %s136 = sphi 0, %s138
      %s139 = sphi 0, %s136
      %s140 = sphi 0, %s139
      %s156 = sphi 0, %s140
      %s162 = sphi 0, %s164
      %s165 = sphi 0, %s162
      %s166 = sphi 0, %s165
      %s182 = sphi 0, %s166
    $region4: #{tpu_custom_call.1} parent=1 // loop_header_branch
      %19 = sbr.rel (%p17) target = $region8
    $region5: #{tpu_custom_call.1} parent=1 // loop_body
      %s21 = ssub.s32 %s16, 1
      %s22 = ssub.s32 %s16, 2
      %s23 = sadd.s32 %s16, 1
      %s24 = ssub.s32 %s16, %s23
      %p25 = scmp.eq.s32.totalorder %s24, 0
      %s27 = sadd.s32 %s26, 1
      %s28 = scalar_select %p25, %s26, %s27
      %p31 = pneg %p25
      %p32 = scmp.eq.s32.totalorder %s16, 1
      %p33 = por %p31, %p32
      %p34 = scmp.ne.s32.totalorder %s26, %s29
      %p35 = scmp.eq.s32.totalorder %s16, 0
      %p36 = por %p34, %p35
      %p37 = scmp.ne.s32.totalorder %s26, %s29
      %p38 = scmp.eq.s32.totalorder %s21, 1
      %p39 = por %p37, %p38
      %p40 = scmp.ne.s32.totalorder %s29, %s30
      %p41 = scmp.eq.s32.totalorder %s21, 0
      %p42 = por %p40, %p41
      %p43 = scmp.ne.s32.totalorder %s29, %s30
      %p44 = scmp.eq.s32.totalorder %s22, 1
      %p45 = por %p43, %p44
      %p47 = scmp.ne.s32.totalorder %s30, %s46
      %p48 = scmp.eq.s32.totalorder %s22, 0
      %p49 = por %p47, %p48
      %s51 = sadd.s32 %s50, 1
      %p54 = scmp.eq.s32.totalorder %s16, 1
      %p55 = scmp.ne.s32.totalorder %s50, %s52
      %p56 = scmp.eq.s32.totalorder %s16, 0
      %p57 = por %p55, %p56
      %p58 = scmp.ne.s32.totalorder %s50, %s52
      %p59 = scmp.eq.s32.totalorder %s21, 1
      %p60 = por %p58, %p59
      %p61 = scmp.ne.s32.totalorder %s52, %s53
      %p62 = scmp.eq.s32.totalorder %s21, 0
      %p63 = por %p61, %p62
      %p64 = scmp.ne.s32.totalorder %s52, %s53
      %p65 = scmp.eq.s32.totalorder %s22, 1
      %p66 = por %p64, %p65
      %p68 = scmp.ne.s32.totalorder %s53, %s67
      %p69 = scmp.eq.s32.totalorder %s22, 0
      %p70 = por %p68, %p69
      %s72 = sadd.s32 %s71, 1
      %p75 = scmp.eq.s32.totalorder %s16, 1
      %p76 = scmp.ne.s32.totalorder %s71, %s73
      %p77 = scmp.eq.s32.totalorder %s16, 0
      %p78 = por %p76, %p77
      %p79 = scmp.ne.s32.totalorder %s71, %s73
      %p80 = scmp.eq.s32.totalorder %s21, 1
      %p81 = por %p79, %p80
      %p82 = scmp.ne.s32.totalorder %s73, %s74
      %p83 = scmp.eq.s32.totalorder %s21, 0
      %p84 = por %p82, %p83
      %p85 = scmp.ne.s32.totalorder %s73, %s74
      %p86 = scmp.eq.s32.totalorder %s22, 1
      %p87 = por %p85, %p86
      %p89 = scmp.ne.s32.totalorder %s74, %s88
      %p90 = scmp.eq.s32.totalorder %s22, 0
      %p91 = por %p89, %p90
      %s93 = sadd.s32 %s92, 1
      %p96 = scmp.eq.s32.totalorder %s16, 1
      %p97 = scmp.ne.s32.totalorder %s92, %s94
      %p98 = scmp.eq.s32.totalorder %s16, 0
      %p99 = por %p97, %p98
      %p100 = scmp.ne.s32.totalorder %s92, %s94
      %p101 = scmp.eq.s32.totalorder %s21, 1
      %p102 = por %p100, %p101
      %p103 = scmp.ne.s32.totalorder %s94, %s95
      %p104 = scmp.eq.s32.totalorder %s21, 0
      %p105 = por %p103, %p104
      %p106 = scmp.ne.s32.totalorder %s94, %s95
      %p107 = scmp.eq.s32.totalorder %s22, 1
      %p108 = por %p106, %p107
      %p110 = scmp.ne.s32.totalorder %s95, %s109
      %p111 = scmp.eq.s32.totalorder %s22, 0
      %p112 = por %p110, %p111
      %s114 = sadd.s32 %s113, 1
      %p117 = scmp.eq.s32.totalorder %s16, 1
      %p118 = scmp.ne.s32.totalorder %s113, %s115
      %p119 = scmp.eq.s32.totalorder %s16, 0
      %p120 = por %p118, %p119
      %p121 = scmp.ne.s32.totalorder %s113, %s115
      %p122 = scmp.eq.s32.totalorder %s21, 1
      %p123 = por %p121, %p122
      %p124 = scmp.ne.s32.totalorder %s115, %s116
      %p125 = scmp.eq.s32.totalorder %s21, 0
      %p126 = por %p124, %p125
      %p127 = scmp.ne.s32.totalorder %s115, %s116
      %p128 = scmp.eq.s32.totalorder %s22, 1
      %p129 = por %p127, %p128
      %p131 = scmp.ne.s32.totalorder %s116, %s130
      %p132 = scmp.eq.s32.totalorder %s22, 0
      %p133 = por %p131, %p132
      %s134 = ssub.s32 %s16, %s23
      %p135 = scmp.eq.s32.totalorder %s134, 0
      %s137 = sadd.s32 %s136, 1
      %s138 = scalar_select %p135, %s136, %s137
      %p141 = pneg %p135
      %p142 = scmp.eq.s32.totalorder %s16, 1
      %p143 = por %p141, %p142
      %p144 = scmp.ne.s32.totalorder %s136, %s139
      %p145 = scmp.eq.s32.totalorder %s16, 0
      %p146 = por %p144, %p145
      %p147 = scmp.ne.s32.totalorder %s136, %s139
      %p148 = scmp.eq.s32.totalorder %s21, 1
      %p149 = por %p147, %p148
      %p150 = scmp.ne.s32.totalorder %s139, %s140
      %p151 = scmp.eq.s32.totalorder %s21, 0
      %p152 = por %p150, %p151
      %p153 = scmp.ne.s32.totalorder %s139, %s140
      %p154 = scmp.eq.s32.totalorder %s22, 1
      %p155 = por %p153, %p154
      %p157 = scmp.ne.s32.totalorder %s140, %s156
      %p158 = scmp.eq.s32.totalorder %s22, 0
      %p159 = por %p157, %p158
      %s160 = ssub.s32 %s16, %s23
      %p161 = scmp.eq.s32.totalorder %s160, 0
      %s163 = sadd.s32 %s162, 1
      %s164 = scalar_select %p161, %s162, %s163
      %p167 = pneg %p161
      %p168 = scmp.eq.s32.totalorder %s16, 1
      %p169 = por %p167, %p168
      %p170 = scmp.ne.s32.totalorder %s162, %s165
      %p171 = scmp.eq.s32.totalorder %s16, 0
      %p172 = por %p170, %p171
      %p173 = scmp.ne.s32.totalorder %s162, %s165
      %p174 = scmp.eq.s32.totalorder %s21, 1
      %p175 = por %p173, %p174
      %p176 = scmp.ne.s32.totalorder %s165, %s166
      %p177 = scmp.eq.s32.totalorder %s21, 0
      %p178 = por %p176, %p177
      %p179 = scmp.ne.s32.totalorder %s165, %s166
      %p180 = scmp.eq.s32.totalorder %s22, 1
      %p181 = por %p179, %p180
      %p183 = scmp.ne.s32.totalorder %s166, %s182
      %p184 = scmp.eq.s32.totalorder %s22, 0
      %p185 = por %p183, %p184
      %p186 = scmp.le.s32.totalorder 1, %s16
      %p187 = scmp.lt.s32.totalorder %s16, 3
      %p188 = pnand %p186, %p187
      %p189 = pneg %p188
      // Predicated region
      $region9: #{tpu_custom_call.1} parent=5 // pred_check
        _
      $region10: #{tpu_custom_call.1} parent=5 // pred_check_branch
        %191 = sbr.rel (%p188) target = $region12
      $region11: #{tpu_custom_call.1} parent=5 // pred_region
        %s192 = ssub.s32 %s16, 1
        // Predicated region
        $region13: #{tpu_custom_call.1} parent=11 // pred_check
          %p193 = pneg %p63
        $region14: #{tpu_custom_call.1} parent=11 // pred_check_branch
          %195 = sbr.rel (%p193) target = $region16
        $region15: #{tpu_custom_call.1} parent=11 // pred_region
          _
        $region16: #{tpu_custom_call.1} parent=11 // pred_fallthru
          _
        // Predicated region
        $region17: #{tpu_custom_call.1} parent=11 // pred_check
          %p196 = pneg %p84
        $region18: #{tpu_custom_call.1} parent=11 // pred_check_branch
          %198 = sbr.rel (%p196) target = $region20
        $region19: #{tpu_custom_call.1} parent=11 // pred_region
          _
        $region20: #{tpu_custom_call.1} parent=11 // pred_fallthru
          _
        // Predicated region
        $region21: #{tpu_custom_call.1} parent=11 // pred_check
          %p199 = pneg %p105
        $region22: #{tpu_custom_call.1} parent=11 // pred_check_branch
          %201 = sbr.rel (%p199) target = $region24
        $region23: #{tpu_custom_call.1} parent=11 // pred_region
          _
        $region24: #{tpu_custom_call.1} parent=11 // pred_fallthru
          _
        // Predicated region
        $region25: #{tpu_custom_call.1} parent=11 // pred_check
          %p202 = pneg %p126
        $region26: #{tpu_custom_call.1} parent=11 // pred_check_branch
          %204 = sbr.rel (%p202) target = $region28
        $region27: #{tpu_custom_call.1} parent=11 // pred_region
          _
        $region28: #{tpu_custom_call.1} parent=11 // pred_fallthru
          _
      $region12: #{tpu_custom_call.1} parent=5 // pred_fallthru
        _
      %p205 = scmp.lt.s32.totalorder %s16, 2
      // Predicated region
      $region29: #{tpu_custom_call.1} parent=5 // pred_check
        %p206 = pneg %p205
      $region30: #{tpu_custom_call.1} parent=5 // pred_check_branch
        %208 = sbr.rel (%p206) target = $region32
      $region31: #{tpu_custom_call.1} parent=5 // pred_region
        // Predicated region
        $region33: #{tpu_custom_call.1} parent=31 // pred_check
          %p209 = pneg %p36
        $region34: #{tpu_custom_call.1} parent=31 // pred_check_branch
          %211 = sbr.rel (%p209) target = $region36
        $region35: #{tpu_custom_call.1} parent=31 // pred_region
          %s212 = smul.u32 4, %s16
          %p213 = scmp.lt.s32.totalorder %s212, 7
          %s214 = scalar_select %p213, %s212, 7
          %s215 = smul.addr %s214, 8
          %s216 = scalar_lea.vmem %s0, %s215
          %s217 = smul.u32 4, %s16
        $region36: #{tpu_custom_call.1} parent=31 // pred_fallthru
          _
      $region32: #{tpu_custom_call.1} parent=5 // pred_fallthru
        _
      %p218 = scmp.le.s32.totalorder 1, %s16
      %p219 = scmp.lt.s32.totalorder %s16, 3
      %p220 = pnand %p218, %p219
      %p221 = pneg %p220
      // Predicated region
      $region37: #{tpu_custom_call.1} parent=5 // pred_check
        _
      $region38: #{tpu_custom_call.1} parent=5 // pred_check_branch
        %223 = sbr.rel (%p220) target = $region40
      $region39: #{tpu_custom_call.1} parent=5 // pred_region
        %s224 = ssub.s32 %s16, 1
        %s225 = smul.u32 4, %s21
        %p226 = scmp.lt.s32.totalorder %s225, 7
        %s227 = scalar_select %p226, %s225, 7
        %s228 = smul.addr %s227, 8
        %s229 = scalar_lea.vmem %s0, %s228
        %p230 = pneg %p42
        %p231 = pneg %p39
        %p232 = pneg %p63
        %p233 = pneg %p60
        %p234 = pneg %p84
        %p235 = pneg %p81
        %p236 = pneg %p105
        %p237 = pneg %p102
        %p238 = pneg %p126
        %p239 = pneg %p123
        %p240 = pneg %p152
        %p241 = pneg %p149
        %s242 = smul.u32 4, %s21
        %p243 = scmp.lt.s32.totalorder %s242, 7
        %s244 = scalar_select %p243, %s242, 7
        %s245 = smul.addr %s244, 8
        %s246 = scalar_lea.vmem %s5, %s245
        %p247 = pneg %p178
        %p248 = pneg %p175
        %s249 = sand.u32 %s165, 1
        %s250 = scalar_lea.sflag [#allocation3], %s249
        %s251 = sand.u32 %s165, 1
        %s252 = smul.addr %s251, 32
        %s253 = scalar_lea.vmem [#allocation2], %s252
        %s254 = smul.u32 4, %s21
        %p255 = scmp.lt.s32.totalorder %s254, 7
        %s256 = scalar_select %p255, %s254, 7
        %s257 = smul.addr %s256, 8
        %s258 = scalar_lea.vmem %s0, %s257
        %s259 = smul.u32 4, %s21
        %s260 = smul.u32 4, %s21
        %p261 = scmp.lt.s32.totalorder %s260, 7
        %s262 = scalar_select %p261, %s260, 7
        %s263 = smul.addr %s262, 8
        %s264 = scalar_lea.vmem %s5, %s263
        %s265 = smul.u32 4, %s21
        %s266 = smul.u32 4, %s21
        %v268 = vld [vmem:[%s258] sm:$0xff]
        %v269 = vld [vmem:[%s258 + $0x8] sm:$0xff]
        %v270 = vld [vmem:[%s258 + $0x10] sm:$0xff]
        %v271 = vld [vmem:[%s258 + $0x18] sm:$0xff]
        %v272 = vpack.c.bf16 %v269, %v268
        %v273 = vpack.c.bf16 %v271, %v270
        %v274 = vld [vmem:[%s1] sm:$0xf]
        %v275 = vld [vmem:[%s1 + $0x4] sm:$0xf]
        %v276 = vld [vmem:[%s2] sm:$0x1]
        %v278 = vperm.slane %v276, 0
        %v282 = vunpack.c.l.b16 %v274
        %v283 = vunpack.c.l.b16 %v275
        %v284 = vpack.c.b16 %v283, %v282
        %vm286 = vcmask 130048
        %v288 = vsel %vm286, %v272, 0
        %v291 = vsel %vm286, %v273, 0
        %293 = vmatpush.bf16.msra.mxu0 0
        %294 = vmatpush.bf16.msra.mxu0 0
        %295 = vmatpush.bf16.msra.mxu0 0
        %296 = vmatpush.bf16.msra.mxu0 0
        %297 = vmatpush.bf16.msra.mxu0 0
        %298 = vmatpush.bf16.msra.mxu0 0
        %299 = vmatpush.bf16.msra.mxu0 0
        %300 = vmatpush.bf16.msra.mxu0 %v284
        %301 = vmatmul.bf16.gmra.mxu0 %v288
        %v302 = vpop.f32.mrf.mxu0
        %v303 = vadd.f32 %v278, %v302
        %v304 = vpop.f32.mrf.mxu0
        %v305 = vadd.f32 %v278, %v304
        %306 = vmatmul.bf16.gmra.mxu0 %v291
        %v307 = vpop.f32.mrf.mxu0
        %v308 = vadd.f32 %v278, %v307
        %v309 = vpop.f32.mrf.mxu0
        %v310 = vadd.f32 %v278, %v309
        %311 = vdwg.mxu0
        %v312 = vmax.f32 %v303, 0.0
        %v313 = vmax.f32 %v305, 0.0
        %v314 = vmax.f32 %v308, 0.0
        %v315 = vmax.f32 %v310, 0.0
        %vm316 = vcmask 261120
        %317 = vst.msk [vmem:[%s264] sm:$0xff] %vm316, %v312
        %318 = vst.msk [vmem:[%s264 + $0x8] sm:$0xff] %vm316, %v313
        %319 = vst.msk [vmem:[%s264 + $0x10] sm:$0xff] %vm316, %v314
        %320 = vst.msk [vmem:[%s264 + $0x18] sm:$0xff] %vm316, %v315
        %v321 = vpack.c.bf16 %v313, %v312
        %v322 = vpack.c.bf16 %v315, %v314
        %v323 = vld [vmem:[%s3] sm:$0xf]
        %v324 = vld [vmem:[%s3 + $0x4] sm:$0xf]
        %v325 = vld [vmem:[%s3 + $0x8] sm:$0xf]
        %v326 = vld [vmem:[%s3 + $0xc] sm:$0xf]
        %v327 = vld [vmem:[%s4] sm:$0x1]
        %v329 = vperm.slane %v327, 0
        %v335 = vunpack.c.l.b16 %v323
        %v336 = vunpack.c.l.b16 %v324
        %v337 = vunpack.c.l.b16 %v325
        %v338 = vunpack.c.l.b16 %v326
        %v339 = vpack.c.b16 %v336, %v335
        %v340 = vpack.c.b16 %v338, %v337
        %v344 = vsel %vm316, %v321, 0
        %v347 = vsel %vm316, %v322, 0
        %349 = vmatpush.bf16.msra.mxu0 0
        %350 = vmatpush.bf16.msra.mxu0 0
        %351 = vmatpush.bf16.msra.mxu0 0
        %352 = vmatpush.bf16.msra.mxu0 0
        %353 = vmatpush.bf16.msra.mxu0 0
        %354 = vmatpush.bf16.msra.mxu0 0
        %355 = vmatpush.bf16.msra.mxu0 %v340
        %356 = vmatpush.bf16.msra.mxu0 %v339
        %357 = vmatmul.bf16.gmra.mxu0 %v344
        %v358 = vpop.f32.mrf.mxu0
        %v359 = vadd.f32 %v329, %v358
        %v360 = vpop.f32.mrf.mxu0
        %v361 = vadd.f32 %v329, %v360
        %362 = vmatmul.bf16.gmra.mxu0 %v347
        %v363 = vpop.f32.mrf.mxu0
        %v364 = vadd.f32 %v329, %v363
        %v365 = vpop.f32.mrf.mxu0
        %v366 = vadd.f32 %v329, %v365
        %367 = vdwg.mxu0
        %v368 = vmax.f32 %v359, 0.0
        %v369 = vmax.f32 %v361, 0.0
        %v370 = vmax.f32 %v364, 0.0
        %v371 = vmax.f32 %v366, 0.0
        %vm372 = vcmask 523264
        %373 = vst.msk [vmem:[%s253] sm:$0xff] %vm372, %v368
        %374 = vst.msk [vmem:[%s253 + $0x8] sm:$0xff] %vm372, %v369
        %375 = vst.msk [vmem:[%s253 + $0x10] sm:$0xff] %vm372, %v370
        %376 = vst.msk [vmem:[%s253 + $0x18] sm:$0xff] %vm372, %v371
        %s377 = smul.u32 4, %s21
        %p378 = scmp.lt.s32.totalorder %s377, 7
        %s379 = scalar_select %p378, %s377, 7
        %s380 = smul.addr %s379, 8
        %s381 = scalar_lea.vmem %s5, %s380
        %s382 = sand.u32 %s165, 1
        %s383 = scalar_lea.sflag [#allocation3], %s382
        %s384 = sand.u32 %s165, 1
        %s385 = smul.addr %s384, 32
        %s386 = scalar_lea.vmem [#allocation2], %s385
        // Predicated region
        $region41: #{tpu_custom_call.1} parent=39 // pred_check
          %p387 = pneg %p149
        $region42: #{tpu_custom_call.1} parent=39 // pred_check_branch
          %389 = sbr.rel (%p387) target = $region44
        $region43: #{tpu_custom_call.1} parent=39 // pred_region
          %s390 = smul.u32 4, %s21
        $region44: #{tpu_custom_call.1} parent=39 // pred_fallthru
          _
        // Predicated region
        $region45: #{tpu_custom_call.1} parent=39 // pred_check
          %p391 = pneg %p175
        $region46: #{tpu_custom_call.1} parent=39 // pred_check_branch
          %393 = sbr.rel (%p391) target = $region48
        $region47: #{tpu_custom_call.1} parent=39 // pred_region
          %s394 = smul.u32 4, %s21
          %396 = vsyncadd %s383, 0
          %s397 = smul.addr %s394, 8
          %s398 = scalar_lea.hbm %s6, %s397
          %s399 = sshll.u32 %s386, 4
          %s400 = int_to_ptr.vmem [resolvable:$true] %s399
          %s401 = sshll.u32 %s398, 4
          %s402 = int_to_ptr.hbm [resolvable:$true] %s401
          %407 = dma.vmem_to_hbm [thread:$0]  %s400, 512, %s402, %s383, 128, 128, 8
        $region48: #{tpu_custom_call.1} parent=39 // pred_fallthru
          _
      $region40: #{tpu_custom_call.1} parent=5 // pred_fallthru
        _
      %p408 = scmp.le.s32.totalorder 2, %s16
      // Predicated region
      $region49: #{tpu_custom_call.1} parent=5 // pred_check
        %p409 = pneg %p408
      $region50: #{tpu_custom_call.1} parent=5 // pred_check_branch
        %411 = sbr.rel (%p409) target = $region52
      $region51: #{tpu_custom_call.1} parent=5 // pred_region
        %s412 = ssub.s32 %s16, 2
        // Predicated region
        $region53: #{tpu_custom_call.1} parent=51 // pred_check
          %p413 = pneg %p155
        $region54: #{tpu_custom_call.1} parent=51 // pred_check_branch
          %415 = sbr.rel (%p413) target = $region56
        $region55: #{tpu_custom_call.1} parent=51 // pred_region
          %s416 = smul.u32 4, %s22
          %p417 = scmp.lt.s32.totalorder %s416, 7
          %s418 = scalar_select %p417, %s416, 7
          %s419 = smul.addr %s418, 8
          %s420 = scalar_lea.vmem %s5, %s419
        $region56: #{tpu_custom_call.1} parent=51 // pred_fallthru
          _
        // Predicated region
        $region57: #{tpu_custom_call.1} parent=51 // pred_check
          %p421 = pneg %p181
        $region58: #{tpu_custom_call.1} parent=51 // pred_check_branch
          %423 = sbr.rel (%p421) target = $region60
        $region59: #{tpu_custom_call.1} parent=51 // pred_region
          %s424 = sand.u32 %s166, 1
          %s425 = scalar_lea.sflag [#allocation3], %s424
          %s426 = sand.u32 %s166, 1
          %s427 = smul.addr %s426, 32
          %s428 = scalar_lea.vmem [#allocation2], %s427
          %430 = dma.done %s425, 512
        $region60: #{tpu_custom_call.1} parent=51 // pred_fallthru
          _
      $region52: #{tpu_custom_call.1} parent=5 // pred_fallthru
        _
    $region6: #{tpu_custom_call.1} parent=1 // loop_footer
      %s20 = sadd.s32 1, %s16
    $region7: #{tpu_custom_call.1} parent=1 // loop_footer_branch
      %15 = sbr.rel target = $region3
    $region8: #{tpu_custom_call.1} parent=1 // loop_exit
      _
    %431 = vsyncpa [#allocation3], 1
    %s432 = scalar_lea.sflag [#allocation3], 1
    %433 = vsyncpa %s432, 1

</llo_original>
